<compile_context>
chip_gen: v6e
topology: v6e:2x2x1
jax: 0.10.0
libtpu: 0.0.40
codegen_flags: <defaults>
</compile_context>

<pallas_src>
import jax
import jax.numpy as jnp
from jax.experimental import pallas as pl
from jax.experimental.pallas import tpu as pltpu

# ---- model hyper-parameters (consistent with the module defaults) -------------
MLP      = 2       # number of hidden Linear(H, H) layers
IN_NODE  = 3
HIDDEN   = 32
OUT_NODE = 1       # the output-layer reduction below assumes OUT_NODE == 1
LRELU    = 0.01
BATCH    = 64
N_LAYERS = MLP + 2
LANE     = 128     # vreg lane width


def _leaky_relu(x, slope=LRELU):
    # max-form: 2 VALU ops (mul + max) vs 3 (cmp + mul + select); identical for 0<slope<1
    return jnp.maximum(x, slope * x)


def relu_mlp_kernel(xT_ref, w_ref, b_ref, oT_ref):
    """Fused MLP forward on one lane-dense batch tile (activations are [feat, TB])."""
    b = b_ref[...]                       # [HIDDEN, N_LAYERS] f32

    # ---- layer 0: Linear(IN_NODE -> H) on the MXU --------------------------------
    # xT_ref is zero-padded to [HIDDEN, TB] (rows IN_NODE.. are zero) and
    # w_slab[0] has zero columns IN_NODE.. , so this equals the skinny matmul.
    h = jnp.dot(w_ref[0], xT_ref[...], preferred_element_type=jnp.float32)
    h = _leaky_relu(h + b[:, 0:1])                       # [H, TB]

    # ---- hidden layers: Linear(H -> H) on the MXU --------------------------------
    for layer in range(1, MLP + 1):                      # static unroll
        h = jnp.dot(w_ref[layer], h, preferred_element_type=jnp.float32)
        h = _leaky_relu(h + b[:, layer:layer + 1])

    # ---- output layer: Linear(H -> 1) as weighted sublane reduction (VPU/XLU) ----
    w_out = w_ref[N_LAYERS - 1][:, 0:1]                  # [H, 1] (stored transposed)
    y = jnp.sum(w_out * h, axis=0, keepdims=True)        # [1, TB]  lane-dense
    y = y + b[0:1, N_LAYERS - 1:N_LAYERS]                # scalar output bias
    oT_ref[...] = y.astype(oT_ref.dtype)


def _pick_tile(b_pad, cap=512):
    """Largest multiple of 128 <= cap that divides b_pad (b_pad is a multiple of 128)."""
    tile = min(b_pad, cap)
    while b_pad % tile:
        tile -= LANE
    return tile


def relu_mlp_forward(x, w_slab, b_slab, *, tile_b=None):
    """x: [B, IN_NODE] f32 -> [B, OUT_NODE] f32.

    Intended to be called under jit so the pad / transpose / slice fuse with the
    pallas_call (at tiny B the wall time is dominated by launch + wrapper HLOs).
    """
    B = x.shape[0]
    b_pad = ((B + LANE - 1) // LANE) * LANE              # lane-pad batch to 128
    if tile_b is None:
        # Single large tile per step for single-TC chips (v5e/v6e). On v7x with
        # B >= 256, pass tile_b = b_pad // 2 (multiple of 128) so the "parallel"
        # batch axis shards across both TensorCores.
        tile_b = _pick_tile(b_pad)
    assert b_pad % tile_b == 0 and tile_b % LANE == 0
    n_tiles = b_pad // tile_b

    # Zero-padded, transposed input: rows 0..IN_NODE-1 hold x.T, the rest are zero
    # (feeds layer 0's MXU matmul); batch lives on the lane axis.
    xT = jnp.zeros((HIDDEN, b_pad), jnp.float32).at[:IN_NODE, :B].set(x.T)

    out_t = pl.pallas_call(
        relu_mlp_kernel,
        out_shape=jax.ShapeDtypeStruct((OUT_NODE, b_pad), jnp.float32),
        grid_spec=pltpu.PrefetchScalarGridSpec(
            num_scalar_prefetch=0,
            grid=(n_tiles,),                                          # (1,) for B<=512
            in_specs=[
                pl.BlockSpec((HIDDEN, tile_b), lambda i: (0, i)),     # padded xT tile
                pl.BlockSpec(w_slab.shape, lambda i: (0, 0, 0)),      # resident weights
                pl.BlockSpec(b_slab.shape, lambda i: (0, 0)),         # resident biases
            ],
            out_specs=pl.BlockSpec((OUT_NODE, tile_b), lambda i: (0, i)),
        ),
        compiler_params=pltpu.CompilerParams(
            dimension_semantics=("parallel",)),
    )(xT, w_slab, b_slab)

    return out_t[:, :B].T                                # [B, OUT_NODE]


def init_params(key):
    """PyTorch-layout params: W [out, in], b [out], U(-1/sqrt(fan_in), 1/sqrt(fan_in))."""
    dims = [IN_NODE] + [HIDDEN] * (MLP + 1) + [OUT_NODE]
    params = []
    for i in range(len(dims) - 1):
        fan_in, fan_out = dims[i], dims[i + 1]
        key, kw, kb = jax.random.split(key, 3)
        bound = 1.0 / (fan_in ** 0.5)
        w = jax.random.uniform(kw, (fan_out, fan_in), jnp.float32, -bound, bound)
        b = jax.random.uniform(kb, (fan_out,), jnp.float32, -bound, bound)
        params.append((w, b))
    return params


def pack_params(params):
    """Pack layers into one weight slab [N_LAYERS, H, H] and one bias slab [H, N_LAYERS]."""
    assert len(params) == N_LAYERS and OUT_NODE == 1
    w_slab = jnp.zeros((N_LAYERS, HIDDEN, HIDDEN), jnp.float32)
    b_slab = jnp.zeros((HIDDEN, N_LAYERS), jnp.float32)

    w0, b0 = params[0]                                    # [H, IN_NODE], [H]
    w_slab = w_slab.at[0, :, :IN_NODE].set(w0)            # zero-padded extra columns
    b_slab = b_slab.at[:, 0].set(b0)

    for i in range(1, N_LAYERS - 1):                      # hidden layers
        wi, bi = params[i]                                # [H, H], [H]
        w_slab = w_slab.at[i].set(wi)
        b_slab = b_slab.at[:, i].set(bi)

    wl, bl = params[-1]                                   # [OUT_NODE, H], [OUT_NODE]
    w_slab = w_slab.at[N_LAYERS - 1, :, 0].set(wl[0])     # stored transposed (col 0)
    b_slab = b_slab.at[0, N_LAYERS - 1].set(bl[0])
    return w_slab, b_slab


def reference_forward(x, params):
    h = x
    for i, (w, b) in enumerate(params):
        h = h @ w.T + b
        if i < len(params) - 1:
            h = jnp.where(h > 0, h, LRELU * h)
    return h


if __name__ == "__main__":
    key = jax.random.PRNGKey(0)
    kx, kp = jax.random.split(key)
    x = jax.random.normal(kx, (BATCH, IN_NODE), jnp.float32)
    params = init_params(kp)
    w_slab, b_slab = pack_params(params)

    fwd = jax.jit(relu_mlp_forward)          # fuse pad/transpose/slice around the kernel
    out = fwd(x, w_slab, b_slab)
    out = jax.block_until_ready(out)

    ref = reference_forward(x, params)
    assert out.shape == (BATCH, OUT_NODE)
    assert jnp.allclose(out, ref, atol=1e-5, rtol=1e-5), "mismatch vs reference"

    print("KERNEL_OK")
</pallas_src>

<mosaic_0001>
module attributes {stable_mosaic.version = 11 : i64} {
  func.func @relu_mlp_kernel(%arg0: i32, %arg1: memref<32x128xf32, #tpu.memory_space<vmem>>, %arg2: memref<4x32x32xf32, #tpu.memory_space<vmem>>, %arg3: memref<32x4xf32, #tpu.memory_space<vmem>>, %arg4: memref<1x128xf32, #tpu.memory_space<vmem>>) attributes {dimension_semantics = [#tpu.dimension_semantics<parallel>], iteration_bounds = array<i64: 1>, scalar_prefetch = 0 : i64, scratch_operands = 0 : i64, tpu.core_type = #tpu.core_type<tc>, window_params = [{transform_indices = @transform_0, window_bounds = array<i64: 32, 128>}, {pipeline_mode = #tpu.pipeline_mode<synchronous>, transform_indices = @transform_1, window_bounds = array<i64: 4, 32, 32>}, {pipeline_mode = #tpu.pipeline_mode<synchronous>, transform_indices = @transform_2, window_bounds = array<i64: 32, 4>}, {transform_indices = @transform_3, window_bounds = array<i64: 1, 128>}]} {
    %c0 = arith.constant 0 : index
    %c0_0 = arith.constant 0 : index
    %0 = vector.load %arg3[%c0, %c0_0] : memref<32x4xf32, #tpu.memory_space<vmem>>, vector<32x4xf32>
    %c0_1 = arith.constant 0 : index
    %c0_2 = arith.constant 0 : index
    %c0_3 = arith.constant 0 : index
    %1 = vector.load %arg2[%c0_1, %c0_2, %c0_3] : memref<4x32x32xf32, #tpu.memory_space<vmem>>, vector<1x32x32xf32>
    %2 = vector.shape_cast %1 : vector<1x32x32xf32> to vector<32x32xf32>
    %c0_4 = arith.constant 0 : index
    %c0_5 = arith.constant 0 : index
    %3 = vector.load %arg1[%c0_4, %c0_5] : memref<32x128xf32, #tpu.memory_space<vmem>>, vector<32x128xf32>
    %cst = arith.constant dense<0.000000e+00> : vector<32x128xf32>
    %4 = tpu.matmul %2, %3, %cst {dimension_numbers = #tpu.dot_dimension_numbers<[1], [0], [0], [1], [0, 0, 1, 1], [], []>} : vector<32x32xf32>, vector<32x128xf32>, vector<32x128xf32> -> vector<32x128xf32>
    %5 = vector.extract_strided_slice %0 {offsets = [0, 0], sizes = [32, 1], strides = [1, 1]} : vector<32x4xf32> to vector<32x1xf32>
    %6 = vector.broadcast %5 : vector<32x1xf32> to vector<32x128xf32>
    %7 = arith.addf %4, %6 : vector<32x128xf32>
    %cst_6 = arith.constant 0.00999999977 : f32
    %8 = vector.broadcast %cst_6 : f32 to vector<32x128xf32>
    %9 = arith.mulf %8, %7 : vector<32x128xf32>
    %10 = arith.maximumf %7, %9 : vector<32x128xf32>
    %c1 = arith.constant 1 : index
    %c0_7 = arith.constant 0 : index
    %c0_8 = arith.constant 0 : index
    %11 = vector.load %arg2[%c1, %c0_7, %c0_8] : memref<4x32x32xf32, #tpu.memory_space<vmem>>, vector<1x32x32xf32>
    %12 = vector.shape_cast %11 : vector<1x32x32xf32> to vector<32x32xf32>
    %cst_9 = arith.constant dense<0.000000e+00> : vector<32x128xf32>
    %13 = tpu.matmul %12, %10, %cst_9 {dimension_numbers = #tpu.dot_dimension_numbers<[1], [0], [0], [1], [0, 0, 1, 1], [], []>} : vector<32x32xf32>, vector<32x128xf32>, vector<32x128xf32> -> vector<32x128xf32>
    %14 = vector.extract_strided_slice %0 {offsets = [0, 1], sizes = [32, 1], strides = [1, 1]} : vector<32x4xf32> to vector<32x1xf32>
    %15 = vector.broadcast %14 : vector<32x1xf32> to vector<32x128xf32>
    %16 = arith.addf %13, %15 : vector<32x128xf32>
    %cst_10 = arith.constant 0.00999999977 : f32
    %17 = vector.broadcast %cst_10 : f32 to vector<32x128xf32>
    %18 = arith.mulf %17, %16 : vector<32x128xf32>
    %19 = arith.maximumf %16, %18 : vector<32x128xf32>
    %c2 = arith.constant 2 : index
    %c0_11 = arith.constant 0 : index
    %c0_12 = arith.constant 0 : index
    %20 = vector.load %arg2[%c2, %c0_11, %c0_12] : memref<4x32x32xf32, #tpu.memory_space<vmem>>, vector<1x32x32xf32>
    %21 = vector.shape_cast %20 : vector<1x32x32xf32> to vector<32x32xf32>
    %cst_13 = arith.constant dense<0.000000e+00> : vector<32x128xf32>
    %22 = tpu.matmul %21, %19, %cst_13 {dimension_numbers = #tpu.dot_dimension_numbers<[1], [0], [0], [1], [0, 0, 1, 1], [], []>} : vector<32x32xf32>, vector<32x128xf32>, vector<32x128xf32> -> vector<32x128xf32>
    %23 = vector.extract_strided_slice %0 {offsets = [0, 2], sizes = [32, 1], strides = [1, 1]} : vector<32x4xf32> to vector<32x1xf32>
    %24 = vector.broadcast %23 : vector<32x1xf32> to vector<32x128xf32>
    %25 = arith.addf %22, %24 : vector<32x128xf32>
    %cst_14 = arith.constant 0.00999999977 : f32
    %26 = vector.broadcast %cst_14 : f32 to vector<32x128xf32>
    %27 = arith.mulf %26, %25 : vector<32x128xf32>
    %28 = arith.maximumf %25, %27 : vector<32x128xf32>
    %c3 = arith.constant 3 : index
    %c0_15 = arith.constant 0 : index
    %c0_16 = arith.constant 0 : index
    %29 = vector.load %arg2[%c3, %c0_15, %c0_16] : memref<4x32x32xf32, #tpu.memory_space<vmem>>, vector<1x32x32xf32>
    %30 = vector.shape_cast %29 : vector<1x32x32xf32> to vector<32x32xf32>
    %31 = vector.extract_strided_slice %30 {offsets = [0, 0], sizes = [32, 1], strides = [1, 1]} : vector<32x32xf32> to vector<32x1xf32>
    %32 = vector.broadcast %31 : vector<32x1xf32> to vector<32x128xf32>
    %33 = arith.mulf %32, %28 : vector<32x128xf32>
    %cst_17 = arith.constant dense<0.000000e+00> : vector<128xf32>
    %34 = vector.multi_reduction <add>, %33, %cst_17 [0] : vector<32x128xf32> to vector<128xf32>
    %35 = vector.shape_cast %34 : vector<128xf32> to vector<1x128xf32>
    %36 = vector.extract_strided_slice %0 {offsets = [0, 3], sizes = [1, 1], strides = [1, 1]} : vector<32x4xf32> to vector<1x1xf32>
    %37 = vector.broadcast %36 : vector<1x1xf32> to vector<1x128xf32>
    %38 = arith.addf %35, %37 : vector<1x128xf32>
    %c0_18 = arith.constant 0 : index
    %c0_19 = arith.constant 0 : index
    %39 = vector.load %arg4[%c0_18, %c0_19] : memref<1x128xf32, #tpu.memory_space<vmem>>, vector<1x128xf32>
    tpu.vector_store %arg4[%c0_18, %c0_19], %38 {strides = array<i32>} : memref<1x128xf32, #tpu.memory_space<vmem>>, vector<1x128xf32>,
    return
  }
  func.func @transform_0(%arg0: i32) -> (i32, i32) {
    %c0_i32 = arith.constant 0 : i32
    %c0_i32_0 = arith.constant 0 : i32
    return %c0_i32, %arg0 : i32, i32
  }
  func.func @transform_1(%arg0: i32) -> (i32, i32, i32) {
    %c0_i32 = arith.constant 0 : i32
    %c0_i32_0 = arith.constant 0 : i32
    %c0_i32_1 = arith.constant 0 : i32
    %c0_i32_2 = arith.constant 0 : i32
    return %c0_i32, %c0_i32_0, %c0_i32_1 : i32, i32, i32
  }
  func.func @transform_2(%arg0: i32) -> (i32, i32) {
    %c0_i32 = arith.constant 0 : i32
    %c0_i32_0 = arith.constant 0 : i32
    %c0_i32_1 = arith.constant 0 : i32
    return %c0_i32, %c0_i32_0 : i32, i32
  }
  func.func @transform_3(%arg0: i32) -> (i32, i32) {
    %c0_i32 = arith.constant 0 : i32
    %c0_i32_0 = arith.constant 0 : i32
    return %c0_i32, %arg0 : i32, i32
  }
}

</mosaic_0001>

<llo_original>
// kernel: relu_mlp_forward.1
$region0: #{relu_mlp_forward.1}
  #allocation0 [shape = 'u32[]', space=smem, size = 0x4, offset = 0x4, fixed_abs, tag = 'smem constant byte address 0x4 - core index']
  #allocation1 [shape = 'u32[144,128]{1,0:T(1,128)}', space=vmem, size = 0x12000, scoped, tag = 'internal scratch']
  %s0 = inlined_call_operand.vmem [shape: f32[32,128], index: 0, kind: input, shape index: {}]
  %s1 = inlined_call_operand.hbm [shape: f32[4,32,32], index: 1, kind: input, shape index: {}]
  %s2 = inlined_call_operand.vmem [shape: f32[32,4], index: 2, kind: input, shape index: {}]
  %s3 = inlined_call_operand.vmem [shape: f32[1,128], index: 3, kind: output, shape index: {}]
  %s4 = sld [smem:[#allocation0]]
  $region26: #{relu_mlp_forward.1} parent=0
    _
  %s6 = ssub.s32 1, %s4
  %s7 = scalar_select 0, %s6, %s4
  $region1: #{relu_mlp_forward.1} parent=0
    #allocation2 [shape = 'u8[65536]{0}', space=vmem, size = 0x10000, scoped, tag = 'input window, operand 1, single buffered']
    #allocation3 [shape = 's32[1]{0}', space=sflag, size = 0x4, scoped, tag = 'scoped memory for relu_mlp_forward.1']
    %8 = vsyncpa [#allocation3], 0
    // Predicated region
    $region2: #{relu_mlp_forward.1} parent=1 // pred_check
      _
    $region3: #{relu_mlp_forward.1} parent=1 // pred_check_branch
      %10 = sbr.rel (0) target = $region5
    $region4: #{relu_mlp_forward.1} parent=1 // pred_region
      _
    $region5: #{relu_mlp_forward.1} parent=1 // pred_fallthru
      _
    // Predicated region
    $region6: #{relu_mlp_forward.1} parent=1 // pred_check
      _
    $region7: #{relu_mlp_forward.1} parent=1 // pred_check_branch
      %12 = sbr.rel (0) target = $region9
    $region8: #{relu_mlp_forward.1} parent=1 // pred_region
      %s14 = ssub.s32 2048, 2048
      %15 = vsyncadd [#allocation3], %s14
      %s16 = sshll.u32 [#allocation2], 4
      %s17 = int_to_ptr.vmem [resolvable:$true] %s16
      %22 = dma.hbm_to_vmem [thread:$0]  %s1, 2048, %s17, [#allocation3], 128, 128, 8
    $region9: #{relu_mlp_forward.1} parent=1 // pred_fallthru
      _
    // Predicated region
    $region10: #{relu_mlp_forward.1} parent=1 // pred_check
      _
    $region11: #{relu_mlp_forward.1} parent=1 // pred_check_branch
      %24 = sbr.rel (0) target = $region13
    $region12: #{relu_mlp_forward.1} parent=1 // pred_region
      _
    $region13: #{relu_mlp_forward.1} parent=1 // pred_fallthru
      _
    // Predicated region
    $region14: #{relu_mlp_forward.1} parent=1 // pred_check
      _
    $region15: #{relu_mlp_forward.1} parent=1 // pred_check_branch
      %26 = sbr.rel (0) target = $region17
    $region16: #{relu_mlp_forward.1} parent=1 // pred_region
      %27 = dma.done [#allocation3], 2048
    $region17: #{relu_mlp_forward.1} parent=1 // pred_fallthru
      _
    %v28 = vld [vmem:[%s2] sm:$0xff]
    %v29 = vld [vmem:[%s2 + $0x8] sm:$0xff]
    %v30 = vld [vmem:[%s2 + $0x10] sm:$0xff]
    %v31 = vld [vmem:[%s2 + $0x18] sm:$0xff]
    %v32 = vld [vmem:[#allocation2] sm:$0xff]
    %v33 = vld [vmem:[#allocation2 + $0x8] sm:$0xff]
    %v34 = vld [vmem:[#allocation2 + $0x10] sm:$0xff]
    %v35 = vld [vmem:[#allocation2 + $0x18] sm:$0xff]
    %v36 = vld [vmem:[%s0] sm:$0xff]
    %v37 = vld [vmem:[%s0 + $0x8] sm:$0xff]
    %v38 = vld [vmem:[%s0 + $0x10] sm:$0xff]
    %v39 = vld [vmem:[%s0 + $0x18] sm:$0xff]
    %41 = vset.pattern.permute.xlu0 0
    %42 = vperm.xlu0 %41, %v28
    %v43 = vpop.permute.xlu0 %42
    %46 = vset.pattern.permute.xlu0 0
    %47 = vperm.xlu0 %46, %v29
    %v48 = vpop.permute.xlu0 %47
    %51 = vset.pattern.permute.xlu0 0
    %52 = vperm.xlu0 %51, %v30
    %v53 = vpop.permute.xlu0 %52
    %56 = vset.pattern.permute.xlu0 0
    %57 = vperm.xlu0 %56, %v31
    %v58 = vpop.permute.xlu0 %57
    %vm60 = vcmask 261120
    %v62 = vsel %vm60, %v32, 0
    %v65 = vsel %vm60, %v33, 0
    %v68 = vsel %vm60, %v34, 0
    %v71 = vsel %vm60, %v35, 0
    %73 = vmatprep.subr.mxu0 0.0
    %74 = vmatpush1.msra.mxu0 0.0
    %75 = vmatprep.subr.mxu0 0.0
    %76 = vmatpush1.msra.mxu0 0.0
    %77 = vmatprep.subr.mxu0 0.0
    %78 = vmatpush1.msra.mxu0 0.0
    %79 = vmatprep.subr.mxu0 0.0
    %80 = vmatpush1.msra.mxu0 0.0
    %81 = vmatprep.subr.mxu0 0.0
    %82 = vmatpush1.msra.mxu0 0.0
    %83 = vmatprep.subr.mxu0 0.0
    %84 = vmatpush1.msra.mxu0 0.0
    %85 = vmatprep.subr.mxu0 0.0
    %86 = vmatpush1.msra.mxu0 0.0
    %87 = vmatprep.subr.mxu0 0.0
    %88 = vmatpush1.msra.mxu0 0.0
    %89 = vmatprep.subr.mxu0 0.0
    %90 = vmatpush1.msra.mxu0 0.0
    %91 = vmatprep.subr.mxu0 0.0
    %92 = vmatpush1.msra.mxu0 0.0
    %93 = vmatprep.subr.mxu0 0.0
    %94 = vmatpush1.msra.mxu0 0.0
    %95 = vmatprep.subr.mxu0 0.0
    %96 = vmatpush1.msra.mxu0 0.0
    %97 = vmatprep.subr.mxu0 0.0
    %98 = vmatpush1.msra.mxu0 %v39
    %99 = vmatprep.subr.mxu0 0.0
    %100 = vmatpush1.msra.mxu0 %v38
    %101 = vmatprep.subr.mxu0 0.0
    %102 = vmatpush1.msra.mxu0 %v37
    %103 = vmatprep.subr.mxu0 0.0
    %104 = vmatpush1.msra.mxu0 %v36
    %105 = vmatprep.subr.mxu0 0.0
    %106 = vmatpush2.msra.mxu0 0.0
    %107 = vmatprep.subr.mxu0 0.0
    %108 = vmatpush2.msra.mxu0 0.0
    %109 = vmatprep.subr.mxu0 0.0
    %110 = vmatpush2.msra.mxu0 0.0
    %111 = vmatprep.subr.mxu0 0.0
    %112 = vmatpush2.msra.mxu0 0.0
    %113 = vmatprep.subr.mxu0 0.0
    %114 = vmatpush2.msra.mxu0 0.0
    %115 = vmatprep.subr.mxu0 0.0
    %116 = vmatpush2.msra.mxu0 0.0
    %117 = vmatprep.subr.mxu0 0.0
    %118 = vmatpush2.msra.mxu0 0.0
    %119 = vmatprep.subr.mxu0 0.0
    %120 = vmatpush2.msra.mxu0 0.0
    %121 = vmatprep.subr.mxu0 0.0
    %122 = vmatpush2.msra.mxu0 0.0
    %123 = vmatprep.subr.mxu0 0.0
    %124 = vmatpush2.msra.mxu0 0.0
    %125 = vmatprep.subr.mxu0 0.0
    %126 = vmatpush2.msra.mxu0 0.0
    %127 = vmatprep.subr.mxu0 0.0
    %128 = vmatpush2.msra.mxu0 0.0
    %129 = vmatprep.subr.mxu0 0.0
    %130 = vmatpush2.msra.mxu0 0.0
    %131 = vmatprep.subr.mxu0 0.0
    %132 = vmatpush2.msra.mxu0 0.0
    %133 = vmatprep.subr.mxu0 0.0
    %134 = vmatpush2.msra.mxu0 0.0
    %135 = vmatprep.subr.mxu0 0.0
    %136 = vmatpush2.msra.mxu0 0.0
    %137 = vmatprep.mubr.f32.mxu0 0.0
    %138 = vmatmul.mubr.f32.gmra.mxu0 %v62
    %v139 = vpop.f32.mrf.mxu0
    %v140 = vadd.f32 %v43, %v139
    %v141 = vpop.f32.mrf.mxu0
    %142 = vmatprep.mubr.f32.mxu0 0.0
    %143 = vmatmul.mubr.f32.gmra.mxu0 %v65
    %v144 = vpop.f32.mrf.mxu0
    %v145 = vadd.f32 %v48, %v144
    %v146 = vpop.f32.mrf.mxu0
    %147 = vmatprep.mubr.f32.mxu0 0.0
    %148 = vmatmul.mubr.f32.gmra.mxu0 %v68
    %v149 = vpop.f32.mrf.mxu0
    %v150 = vadd.f32 %v53, %v149
    %v151 = vpop.f32.mrf.mxu0
    %152 = vmatprep.mubr.f32.mxu0 0.0
    %153 = vmatmul.mubr.f32.gmra.mxu0 %v71
    %v154 = vpop.f32.mrf.mxu0
    %v155 = vadd.f32 %v58, %v154
    %v156 = vpop.f32.mrf.mxu0
    %157 = vdwg.mxu0
    %v158 = vmul.f32 %v140, 0.01
    %v159 = vmul.f32 %v145, 0.01
    %v160 = vmul.f32 %v150, 0.01
    %v161 = vmul.f32 %v155, 0.01
    %v162 = vmax.f32 %v140, %v158
    %v163 = vmax.f32 %v145, %v159
    %v164 = vmax.f32 %v150, %v160
    %v165 = vmax.f32 %v155, %v161
    %s166 = scalar_lea.vmem [#allocation2], 32
    %v167 = vld [vmem:[%s166] sm:$0xff]
    %v168 = vld [vmem:[%s166 + $0x8] sm:$0xff]
    %v169 = vld [vmem:[%s166 + $0x10] sm:$0xff]
    %v170 = vld [vmem:[%s166 + $0x18] sm:$0xff]
    %171 = vset.pattern.permute.xlu0 1
    %172 = vperm.xlu0 %171, %v28
    %v173 = vpop.permute.xlu0 %172
    %175 = vset.pattern.permute.xlu0 1
    %176 = vperm.xlu0 %175, %v29
    %v177 = vpop.permute.xlu0 %176
    %179 = vset.pattern.permute.xlu0 1
    %180 = vperm.xlu0 %179, %v30
    %v181 = vpop.permute.xlu0 %180
    %183 = vset.pattern.permute.xlu0 1
    %184 = vperm.xlu0 %183, %v31
    %v185 = vpop.permute.xlu0 %184
    %v188 = vsel %vm60, %v167, 0
    %v191 = vsel %vm60, %v168, 0
    %v194 = vsel %vm60, %v169, 0
    %v197 = vsel %vm60, %v170, 0
    %199 = vmatprep.subr.mxu0 0.0
    %200 = vmatpush1.msra.mxu0 0.0
    %201 = vmatprep.subr.mxu0 0.0
    %202 = vmatpush1.msra.mxu0 0.0
    %203 = vmatprep.subr.mxu0 0.0
    %204 = vmatpush1.msra.mxu0 0.0
    %205 = vmatprep.subr.mxu0 0.0
    %206 = vmatpush1.msra.mxu0 0.0
    %207 = vmatprep.subr.mxu0 0.0
    %208 = vmatpush1.msra.mxu0 0.0
    %209 = vmatprep.subr.mxu0 0.0
    %210 = vmatpush1.msra.mxu0 0.0
    %211 = vmatprep.subr.mxu0 0.0
    %212 = vmatpush1.msra.mxu0 0.0
    %213 = vmatprep.subr.mxu0 0.0
    %214 = vmatpush1.msra.mxu0 0.0
    %215 = vmatprep.subr.mxu0 0.0
    %216 = vmatpush1.msra.mxu0 0.0
    %217 = vmatprep.subr.mxu0 0.0
    %218 = vmatpush1.msra.mxu0 0.0
    %219 = vmatprep.subr.mxu0 0.0
    %220 = vmatpush1.msra.mxu0 0.0
    %221 = vmatprep.subr.mxu0 0.0
    %222 = vmatpush1.msra.mxu0 0.0
    %223 = vmatprep.subr.mxu0 0.0
    %224 = vmatpush1.msra.mxu0 %v165
    %225 = vmatprep.subr.mxu0 0.0
    %226 = vmatpush1.msra.mxu0 %v164
    %227 = vmatprep.subr.mxu0 0.0
    %228 = vmatpush1.msra.mxu0 %v163
    %229 = vmatprep.subr.mxu0 0.0
    %230 = vmatpush1.msra.mxu0 %v162
    %231 = vmatprep.subr.mxu0 0.0
    %232 = vmatpush2.msra.mxu0 0.0
    %233 = vmatprep.subr.mxu0 0.0
    %234 = vmatpush2.msra.mxu0 0.0
    %235 = vmatprep.subr.mxu0 0.0
    %236 = vmatpush2.msra.mxu0 0.0
    %237 = vmatprep.subr.mxu0 0.0
    %238 = vmatpush2.msra.mxu0 0.0
    %239 = vmatprep.subr.mxu0 0.0
    %240 = vmatpush2.msra.mxu0 0.0
    %241 = vmatprep.subr.mxu0 0.0
    %242 = vmatpush2.msra.mxu0 0.0
    %243 = vmatprep.subr.mxu0 0.0
    %244 = vmatpush2.msra.mxu0 0.0
    %245 = vmatprep.subr.mxu0 0.0
    %246 = vmatpush2.msra.mxu0 0.0
    %247 = vmatprep.subr.mxu0 0.0
    %248 = vmatpush2.msra.mxu0 0.0
    %249 = vmatprep.subr.mxu0 0.0
    %250 = vmatpush2.msra.mxu0 0.0
    %251 = vmatprep.subr.mxu0 0.0
    %252 = vmatpush2.msra.mxu0 0.0
    %253 = vmatprep.subr.mxu0 0.0
    %254 = vmatpush2.msra.mxu0 0.0
    %255 = vmatprep.subr.mxu0 0.0
    %256 = vmatpush2.msra.mxu0 0.0
    %257 = vmatprep.subr.mxu0 0.0
    %258 = vmatpush2.msra.mxu0 0.0
    %259 = vmatprep.subr.mxu0 0.0
    %260 = vmatpush2.msra.mxu0 0.0
    %261 = vmatprep.subr.mxu0 0.0
    %262 = vmatpush2.msra.mxu0 0.0
    %263 = vmatprep.mubr.f32.mxu0 0.0
    %264 = vmatmul.mubr.f32.gmra.mxu0 %v188
    %v265 = vpop.f32.mrf.mxu0
    %v266 = vadd.f32 %v173, %v265
    %v267 = vpop.f32.mrf.mxu0
    %268 = vmatprep.mubr.f32.mxu0 0.0
    %269 = vmatmul.mubr.f32.gmra.mxu0 %v191
    %v270 = vpop.f32.mrf.mxu0
    %v271 = vadd.f32 %v177, %v270
    %v272 = vpop.f32.mrf.mxu0
    %273 = vmatprep.mubr.f32.mxu0 0.0
    %274 = vmatmul.mubr.f32.gmra.mxu0 %v194
    %v275 = vpop.f32.mrf.mxu0
    %v276 = vadd.f32 %v181, %v275
    %v277 = vpop.f32.mrf.mxu0
    %278 = vmatprep.mubr.f32.mxu0 0.0
    %279 = vmatmul.mubr.f32.gmra.mxu0 %v197
    %v280 = vpop.f32.mrf.mxu0
    %v281 = vadd.f32 %v185, %v280
    %v282 = vpop.f32.mrf.mxu0
    %283 = vdwg.mxu0
    %v284 = vmul.f32 %v266, 0.01
    %v285 = vmul.f32 %v271, 0.01
    %v286 = vmul.f32 %v276, 0.01
    %v287 = vmul.f32 %v281, 0.01
    %v288 = vmax.f32 %v266, %v284
    %v289 = vmax.f32 %v271, %v285
    %v290 = vmax.f32 %v276, %v286
    %v291 = vmax.f32 %v281, %v287
    %s292 = scalar_lea.vmem [#allocation2], 64
    %v293 = vld [vmem:[%s292] sm:$0xff]
    %v294 = vld [vmem:[%s292 + $0x8] sm:$0xff]
    %v295 = vld [vmem:[%s292 + $0x10] sm:$0xff]
    %v296 = vld [vmem:[%s292 + $0x18] sm:$0xff]
    %297 = vset.pattern.permute.xlu0 2
    %298 = vperm.xlu0 %297, %v28
    %v299 = vpop.permute.xlu0 %298
    %301 = vset.pattern.permute.xlu0 2
    %302 = vperm.xlu0 %301, %v29
    %v303 = vpop.permute.xlu0 %302
    %305 = vset.pattern.permute.xlu0 2
    %306 = vperm.xlu0 %305, %v30
    %v307 = vpop.permute.xlu0 %306
    %309 = vset.pattern.permute.xlu0 2
    %310 = vperm.xlu0 %309, %v31
    %v311 = vpop.permute.xlu0 %310
    %v314 = vsel %vm60, %v293, 0
    %v317 = vsel %vm60, %v294, 0
    %v320 = vsel %vm60, %v295, 0
    %v323 = vsel %vm60, %v296, 0
    %325 = vmatprep.subr.mxu0 0.0
    %326 = vmatpush1.msra.mxu0 0.0
    %327 = vmatprep.subr.mxu0 0.0
    %328 = vmatpush1.msra.mxu0 0.0
    %329 = vmatprep.subr.mxu0 0.0
    %330 = vmatpush1.msra.mxu0 0.0
    %331 = vmatprep.subr.mxu0 0.0
    %332 = vmatpush1.msra.mxu0 0.0
    %333 = vmatprep.subr.mxu0 0.0
    %334 = vmatpush1.msra.mxu0 0.0
    %335 = vmatprep.subr.mxu0 0.0
    %336 = vmatpush1.msra.mxu0 0.0
    %337 = vmatprep.subr.mxu0 0.0
    %338 = vmatpush1.msra.mxu0 0.0
    %339 = vmatprep.subr.mxu0 0.0
    %340 = vmatpush1.msra.mxu0 0.0
    %341 = vmatprep.subr.mxu0 0.0
    %342 = vmatpush1.msra.mxu0 0.0
    %343 = vmatprep.subr.mxu0 0.0
    %344 = vmatpush1.msra.mxu0 0.0
    %345 = vmatprep.subr.mxu0 0.0
    %346 = vmatpush1.msra.mxu0 0.0
    %347 = vmatprep.subr.mxu0 0.0
    %348 = vmatpush1.msra.mxu0 0.0
    %349 = vmatprep.subr.mxu0 0.0
    %350 = vmatpush1.msra.mxu0 %v291
    %351 = vmatprep.subr.mxu0 0.0
    %352 = vmatpush1.msra.mxu0 %v290
    %353 = vmatprep.subr.mxu0 0.0
    %354 = vmatpush1.msra.mxu0 %v289
    %355 = vmatprep.subr.mxu0 0.0
    %356 = vmatpush1.msra.mxu0 %v288
    %357 = vmatprep.subr.mxu0 0.0
    %358 = vmatpush2.msra.mxu0 0.0
    %359 = vmatprep.subr.mxu0 0.0
    %360 = vmatpush2.msra.mxu0 0.0
    %361 = vmatprep.subr.mxu0 0.0
    %362 = vmatpush2.msra.mxu0 0.0
    %363 = vmatprep.subr.mxu0 0.0
    %364 = vmatpush2.msra.mxu0 0.0
    %365 = vmatprep.subr.mxu0 0.0
    %366 = vmatpush2.msra.mxu0 0.0
    %367 = vmatprep.subr.mxu0 0.0
    %368 = vmatpush2.msra.mxu0 0.0
    %369 = vmatprep.subr.mxu0 0.0
    %370 = vmatpush2.msra.mxu0 0.0
    %371 = vmatprep.subr.mxu0 0.0
    %372 = vmatpush2.msra.mxu0 0.0
    %373 = vmatprep.subr.mxu0 0.0
    %374 = vmatpush2.msra.mxu0 0.0
    %375 = vmatprep.subr.mxu0 0.0
    %376 = vmatpush2.msra.mxu0 0.0
    %377 = vmatprep.subr.mxu0 0.0
    %378 = vmatpush2.msra.mxu0 0.0
    %379 = vmatprep.subr.mxu0 0.0
    %380 = vmatpush2.msra.mxu0 0.0
    %381 = vmatprep.subr.mxu0 0.0
    %382 = vmatpush2.msra.mxu0 0.0
    %383 = vmatprep.subr.mxu0 0.0
    %384 = vmatpush2.msra.mxu0 0.0
    %385 = vmatprep.subr.mxu0 0.0
    %386 = vmatpush2.msra.mxu0 0.0
    %387 = vmatprep.subr.mxu0 0.0
    %388 = vmatpush2.msra.mxu0 0.0
    %389 = vmatprep.mubr.f32.mxu0 0.0
    %390 = vmatmul.mubr.f32.gmra.mxu0 %v314
    %v391 = vpop.f32.mrf.mxu0
    %v392 = vadd.f32 %v299, %v391
    %v393 = vpop.f32.mrf.mxu0
    %394 = vmatprep.mubr.f32.mxu0 0.0
    %395 = vmatmul.mubr.f32.gmra.mxu0 %v317
    %v396 = vpop.f32.mrf.mxu0
    %v397 = vadd.f32 %v303, %v396
    %v398 = vpop.f32.mrf.mxu0
    %399 = vmatprep.mubr.f32.mxu0 0.0
    %400 = vmatmul.mubr.f32.gmra.mxu0 %v320
    %v401 = vpop.f32.mrf.mxu0
    %v402 = vadd.f32 %v307, %v401
    %v403 = vpop.f32.mrf.mxu0
    %404 = vmatprep.mubr.f32.mxu0 0.0
    %405 = vmatmul.mubr.f32.gmra.mxu0 %v323
    %v406 = vpop.f32.mrf.mxu0
    %v407 = vadd.f32 %v311, %v406
    %v408 = vpop.f32.mrf.mxu0
    %409 = vdwg.mxu0
    %v410 = vmul.f32 %v392, 0.01
    %v411 = vmul.f32 %v397, 0.01
    %v412 = vmul.f32 %v402, 0.01
    %v413 = vmul.f32 %v407, 0.01
    %v414 = vmax.f32 %v392, %v410
    %v415 = vmax.f32 %v397, %v411
    %v416 = vmax.f32 %v402, %v412
    %v417 = vmax.f32 %v407, %v413
    %s418 = scalar_lea.vmem [#allocation2], 96
    %v419 = vld [vmem:[%s418] sm:$0xff]
    %v420 = vld [vmem:[%s418 + $0x8] sm:$0xff]
    %v421 = vld [vmem:[%s418 + $0x10] sm:$0xff]
    %v422 = vld [vmem:[%s418 + $0x18] sm:$0xff]
    %424 = vset.pattern.permute.xlu0 0
    %425 = vperm.xlu0 %424, %v419
    %v426 = vpop.permute.xlu0 %425
    %429 = vset.pattern.permute.xlu0 0
    %430 = vperm.xlu0 %429, %v420
    %v431 = vpop.permute.xlu0 %430
    %434 = vset.pattern.permute.xlu0 0
    %435 = vperm.xlu0 %434, %v421
    %v436 = vpop.permute.xlu0 %435
    %439 = vset.pattern.permute.xlu0 0
    %440 = vperm.xlu0 %439, %v422
    %v441 = vpop.permute.xlu0 %440
    %v443 = vmul.f32 %v426, %v414
    %v444 = vmul.f32 %v431, %v415
    %v445 = vmul.f32 %v436, %v416
    %v446 = vmul.f32 %v441, %v417
    %v447 = vadd.f32 %v443, %v444
    %v448 = vadd.f32 %v447, %v445
    %v449 = vadd.f32 %v448, %v446
    %v450 = vrot.slane %v449, 4
    %v451 = vadd.f32 %v449, %v450
    %v452 = vrot.slane %v451, 2
    %v453 = vadd.f32 %v451, %v452
    %v454 = vrot.slane %v453, 1
    %v455 = vadd.f32 %v453, %v454
    %456 = vset.pattern.permute.xlu0 3
    %457 = vperm.xlu0 %456, %v28
    %v458 = vpop.permute.xlu0 %457
    %v460 = vadd.f32 %v455, %v458
    %461 = vst [vmem:[%s3] sm:$0x1] %v460
    // Predicated region
    $region18: #{relu_mlp_forward.1} parent=1 // pred_check
      _
    $region19: #{relu_mlp_forward.1} parent=1 // pred_check_branch
      %463 = sbr.rel (0) target = $region21
    $region20: #{relu_mlp_forward.1} parent=1 // pred_region
      _
    $region21: #{relu_mlp_forward.1} parent=1 // pred_fallthru
      _
    // Predicated region
    $region22: #{relu_mlp_forward.1} parent=1 // pred_check
      _
    $region23: #{relu_mlp_forward.1} parent=1 // pred_check_branch
      %465 = sbr.rel (0) target = $region25
    $region24: #{relu_mlp_forward.1} parent=1 // pred_region
      _
    $region25: #{relu_mlp_forward.1} parent=1 // pred_fallthru
      _
    %466 = vsyncpa [#allocation3], 1

</llo_original>
